<compile_context>
chip_gen: v6e
topology: v6e:2x2x1
jax: 0.10.0
libtpu: 0.0.40
codegen_flags: <defaults>
</compile_context>

<pallas_src>
import functools

import jax
import jax.numpy as jnp
from jax.experimental import pallas as pl
from jax.experimental.pallas import tpu as pltpu


# -----------------------------------------------------------------------------
# Kernel 1: conv-as-matmul (im2col done in the wrapper) + per-tile BN statistics
# -----------------------------------------------------------------------------
def _conv_stats_kernel(p_ref, w_ref, y_ref, s_ref):
    """p_ref: (TM, K) bf16 patch rows, w_ref: (K, Cpad) bf16 weights,
    y_ref: (TM, Cpad) f32 conv output tile,
    s_ref: (1, 2, Cpad) f32 partial stats (row 0 = sum, row 1 = sum of squares)."""
    acc = jnp.dot(p_ref[...], w_ref[...], preferred_element_type=jnp.float32)
    y_ref[...] = acc
    ssum = jnp.sum(acc, axis=0, keepdims=True)          # (1, Cpad)
    ssq = jnp.sum(acc * acc, axis=0, keepdims=True)     # (1, Cpad)
    s_ref[...] = jnp.concatenate([ssum, ssq], axis=0)[None]


# -----------------------------------------------------------------------------
# Kernel 2: apply BatchNorm (precomputed scale/shift) + LeakyReLU
# -----------------------------------------------------------------------------
def _bn_lrelu_kernel(y_ref, sc_ref, sh_ref, o_ref, *, neg_slope):
    z = y_ref[...] * sc_ref[...] + sh_ref[...]
    o_ref[...] = jnp.maximum(z, neg_slope * z).astype(o_ref.dtype)


def _pick_row_tile(m):
    for t in (256, 128, 64, 32, 16, 8):
        if m % t == 0:
            return t
    return m  # tiny / ragged fallback: a single full-extent block


def conv_bn_lrelu(x_nchw, weight_oihw, gamma, beta, *, stride, padding,
                  eps=1e-5, neg_slope=0.1):
    n, cin, h, w = x_nchw.shape
    cout, _, kh, kw = weight_oihw.shape
    h_out = (h + 2 * padding - kh) // stride + 1
    w_out = (w + 2 * padding - kw) // stride + 1

    m_rows = n * h_out * w_out
    k_tot = kh * kw * cin
    cpad = ((cout + 127) // 128) * 128          # lane-dense output channels

    # ---- wrapper glue: layout + zero-pad + im2col, bf16 operands for the MXU ----
    x = jnp.transpose(x_nchw, (0, 2, 3, 1))                                  # NHWC
    xp = jnp.pad(x, ((0, 0), (padding, padding), (padding, padding), (0, 0)))
    taps = []
    for i in range(kh):
        for j in range(kw):
            taps.append(xp[:, i:i + (h_out - 1) * stride + 1:stride,
                              j:j + (w_out - 1) * stride + 1:stride, :])
    patches = jnp.stack(taps, axis=3)                     # (N, Ho, Wo, KH*KW, Cin)
    patches = patches.reshape(m_rows, k_tot).astype(jnp.bfloat16)

    w2d = jnp.transpose(weight_oihw, (2, 3, 1, 0)).reshape(k_tot, cout)
    w2d = jnp.pad(w2d, ((0, 0), (0, cpad - cout))).astype(jnp.bfloat16)

    tm = _pick_row_tile(m_rows)
    n_tiles = m_rows // tm

    cparams = pltpu.CompilerParams(
        dimension_semantics=("parallel",),
        vmem_limit_bytes=32 * 1024 * 1024,
    )

    # ---- pass 1: conv matmul + per-tile partial BN statistics ----
    y, stats = pl.pallas_call(
        _conv_stats_kernel,
        out_shape=(jax.ShapeDtypeStruct((m_rows, cpad), jnp.float32),
                   jax.ShapeDtypeStruct((n_tiles, 2, cpad), jnp.float32)),
        grid=(n_tiles,),
        in_specs=[pl.BlockSpec((tm, k_tot), lambda i: (i, 0)),
                  pl.BlockSpec((k_tot, cpad), lambda i: (0, 0))],
        out_specs=(pl.BlockSpec((tm, cpad), lambda i: (i, 0)),
                   pl.BlockSpec((1, 2, cpad), lambda i: (i, 0, 0))),
        compiler_params=cparams,
    )(patches, w2d)

    # ---- tiny reduction of the per-tile stats + BN scale/shift (plain XLA) ----
    tot = jnp.sum(stats, axis=0)                                   # (2, Cpad)
    count = jnp.float32(m_rows)
    mean = tot[0] / count
    var = jnp.maximum(tot[1] / count - mean * mean, 0.0)           # biased variance
    gamma_p = jnp.pad(gamma.astype(jnp.float32), (0, cpad - cout),
                      constant_values=1.0)
    beta_p = jnp.pad(beta.astype(jnp.float32), (0, cpad - cout))
    scale = gamma_p * jax.lax.rsqrt(var + eps)
    shift = beta_p - mean * scale
    # TODO(synk): BatchNorm running_mean/running_var momentum updates are a stateful
    # training side effect and are not reproduced (does not affect forward output).

    # ---- pass 2: normalize + LeakyReLU on lane-dense tiles ----
    out2d = pl.pallas_call(
        functools.partial(_bn_lrelu_kernel, neg_slope=neg_slope),
        out_shape=jax.ShapeDtypeStruct((m_rows, cpad), x_nchw.dtype),
        grid=(n_tiles,),
        in_specs=[pl.BlockSpec((tm, cpad), lambda i: (i, 0)),
                  pl.BlockSpec((1, cpad), lambda i: (0, 0)),
                  pl.BlockSpec((1, cpad), lambda i: (0, 0))],
        out_specs=pl.BlockSpec((tm, cpad), lambda i: (i, 0)),
        compiler_params=cparams,
    )(y, scale.reshape(1, cpad), shift.reshape(1, cpad))

    out = out2d.reshape(n, h_out, w_out, cpad)[..., :cout]
    return jnp.transpose(out, (0, 3, 1, 2))                        # back to NCHW


if __name__ == "__main__":
    key = jax.random.PRNGKey(0)
    k_x, k_w = jax.random.split(key)

    # ConvolutionalLayer(in_channels=4, out_channels=8, kernel_size=3, stride=1, padding=1)
    N, C_in, H, W = 2, 4, 16, 16
    C_out, K, S, P = 8, 3, 1, 1

    x = jax.random.normal(k_x, (N, C_in, H, W), jnp.float32)
    fan_in = C_in * K * K
    weight = jax.random.normal(k_w, (C_out, C_in, K, K), jnp.float32) / jnp.sqrt(fan_in)
    gamma = jnp.ones((C_out,), jnp.float32)   # PyTorch BatchNorm2d default init
    beta = jnp.zeros((C_out,), jnp.float32)

    fwd = jax.jit(functools.partial(conv_bn_lrelu, stride=S, padding=P))
    out = jax.block_until_ready(fwd(x, weight, gamma, beta))
    assert out.shape == (N, C_out, H, W), out.shape

    # Loose sanity check vs. a high-precision XLA reference (kernel uses bf16 MXU ops).
    conv_ref = jax.lax.conv_general_dilated(
        x, weight, window_strides=(S, S), padding=[(P, P), (P, P)],
        dimension_numbers=("NCHW", "OIHW", "NCHW"),
        precision=jax.lax.Precision.HIGHEST)
    mu = conv_ref.mean(axis=(0, 2, 3), keepdims=True)
    va = conv_ref.var(axis=(0, 2, 3), keepdims=True)
    ref = (conv_ref - mu) * jax.lax.rsqrt(va + 1e-5)
    ref = ref * gamma.reshape(1, -1, 1, 1) + beta.reshape(1, -1, 1, 1)
    ref = jnp.maximum(ref, 0.1 * ref)
    err = float(jnp.max(jnp.abs(out - ref)))
    assert err < 1e-1, f"max abs err {err}"

    print("KERNEL_OK")
</pallas_src>

<mosaic_0001>
module attributes {stable_mosaic.version = 11 : i64} {
  func.func @_conv_stats_kernel(%arg0: i32, %arg1: memref<256x36xbf16, #tpu.memory_space<vmem>>, %arg2: memref<36x128xbf16, #tpu.memory_space<vmem>>, %arg3: memref<256x128xf32, #tpu.memory_space<vmem>>, %arg4: memref<1x2x128xf32, #tpu.memory_space<vmem>>) attributes {dimension_semantics = [#tpu.dimension_semantics<parallel>], iteration_bounds = array<i64: 2>, scalar_prefetch = 0 : i64, scratch_operands = 0 : i64, tpu.core_type = #tpu.core_type<tc>, window_params = [{transform_indices = @transform_0, window_bounds = array<i64: 256, 36>}, {pipeline_mode = #tpu.pipeline_mode<synchronous>, transform_indices = @transform_1, window_bounds = array<i64: 36, 128>}, {transform_indices = @transform_2, window_bounds = array<i64: 256, 128>}, {transform_indices = @transform_3, window_bounds = array<i64: 1, 2, 128>}]} {
    %c0 = arith.constant 0 : index
    %c0_0 = arith.constant 0 : index
    %0 = vector.load %arg1[%c0, %c0_0] : memref<256x36xbf16, #tpu.memory_space<vmem>>, vector<256x36xbf16>
    %c0_1 = arith.constant 0 : index
    %c0_2 = arith.constant 0 : index
    %1 = vector.load %arg2[%c0_1, %c0_2] : memref<36x128xbf16, #tpu.memory_space<vmem>>, vector<36x128xbf16>
    %cst = arith.constant dense<0.000000e+00> : vector<256x128xf32>
    %2 = tpu.matmul %0, %1, %cst {dimension_numbers = #tpu.dot_dimension_numbers<[1], [0], [0], [1], [0, 0, 1, 1], [], []>} : vector<256x36xbf16>, vector<36x128xbf16>, vector<256x128xf32> -> vector<256x128xf32>
    %c0_3 = arith.constant 0 : index
    %c0_4 = arith.constant 0 : index
    %3 = vector.load %arg3[%c0_3, %c0_4] : memref<256x128xf32, #tpu.memory_space<vmem>>, vector<256x128xf32>
    tpu.vector_store %arg3[%c0_3, %c0_4], %2 {strides = array<i32>} : memref<256x128xf32, #tpu.memory_space<vmem>>, vector<256x128xf32>,
    %cst_5 = arith.constant dense<0.000000e+00> : vector<128xf32>
    %4 = vector.multi_reduction <add>, %2, %cst_5 [0] : vector<256x128xf32> to vector<128xf32>
    %5 = vector.shape_cast %4 : vector<128xf32> to vector<1x128xf32>
    %6 = arith.mulf %2, %2 : vector<256x128xf32>
    %cst_6 = arith.constant dense<0.000000e+00> : vector<128xf32>
    %7 = vector.multi_reduction <add>, %6, %cst_6 [0] : vector<256x128xf32> to vector<128xf32>
    %8 = vector.shape_cast %7 : vector<128xf32> to vector<1x128xf32>
    %9 = tpu.concatenate %5, %8 in 0 : vector<1x128xf32>, vector<1x128xf32> -> vector<2x128xf32>
    %10 = vector.shape_cast %9 : vector<2x128xf32> to vector<1x2x128xf32>
    %c0_7 = arith.constant 0 : index
    %c0_8 = arith.constant 0 : index
    %c0_9 = arith.constant 0 : index
    %11 = vector.load %arg4[%c0_7, %c0_8, %c0_9] : memref<1x2x128xf32, #tpu.memory_space<vmem>>, vector<1x2x128xf32>
    tpu.vector_store %arg4[%c0_7, %c0_8, %c0_9], %10 {strides = array<i32>} : memref<1x2x128xf32, #tpu.memory_space<vmem>>, vector<1x2x128xf32>,
    return
  }
  func.func @transform_0(%arg0: i32) -> (i32, i32) {
    %c0_i32 = arith.constant 0 : i32
    %c0_i32_0 = arith.constant 0 : i32
    return %arg0, %c0_i32 : i32, i32
  }
  func.func @transform_1(%arg0: i32) -> (i32, i32) {
    %c0_i32 = arith.constant 0 : i32
    %c0_i32_0 = arith.constant 0 : i32
    %c0_i32_1 = arith.constant 0 : i32
    return %c0_i32, %c0_i32_0 : i32, i32
  }
  func.func @transform_2(%arg0: i32) -> (i32, i32) {
    %c0_i32 = arith.constant 0 : i32
    %c0_i32_0 = arith.constant 0 : i32
    return %arg0, %c0_i32 : i32, i32
  }
  func.func @transform_3(%arg0: i32) -> (i32, i32, i32) {
    %c0_i32 = arith.constant 0 : i32
    %c0_i32_0 = arith.constant 0 : i32
    %c0_i32_1 = arith.constant 0 : i32
    return %arg0, %c0_i32, %c0_i32_0 : i32, i32, i32
  }
}

module attributes {stable_mosaic.version = 11 : i64} {
  func.func @_bn_lrelu_kernel(%arg0: i32, %arg1: memref<256x128xf32, #tpu.memory_space<vmem>>, %arg2: memref<1x128xf32, #tpu.memory_space<vmem>>, %arg3: memref<1x128xf32, #tpu.memory_space<vmem>>, %arg4: memref<256x128xf32, #tpu.memory_space<vmem>>) attributes {dimension_semantics = [#tpu.dimension_semantics<parallel>], iteration_bounds = array<i64: 2>, scalar_prefetch = 0 : i64, scratch_operands = 0 : i64, tpu.core_type = #tpu.core_type<tc>, window_params = [{transform_indices = @transform_0, window_bounds = array<i64: 256, 128>}, {pipeline_mode = #tpu.pipeline_mode<synchronous>, transform_indices = @transform_1, window_bounds = array<i64: 1, 128>}, {pipeline_mode = #tpu.pipeline_mode<synchronous>, transform_indices = @transform_2, window_bounds = array<i64: 1, 128>}, {transform_indices = @transform_3, window_bounds = array<i64: 256, 128>}]} {
    %c0 = arith.constant 0 : index
    %c0_0 = arith.constant 0 : index
    %0 = vector.load %arg1[%c0, %c0_0] : memref<256x128xf32, #tpu.memory_space<vmem>>, vector<256x128xf32>
    %c0_1 = arith.constant 0 : index
    %c0_2 = arith.constant 0 : index
    %1 = vector.load %arg2[%c0_1, %c0_2] : memref<1x128xf32, #tpu.memory_space<vmem>>, vector<1x128xf32>
    %2 = vector.broadcast %1 : vector<1x128xf32> to vector<256x128xf32>
    %3 = arith.mulf %0, %2 : vector<256x128xf32>
    %c0_3 = arith.constant 0 : index
    %c0_4 = arith.constant 0 : index
    %4 = vector.load %arg3[%c0_3, %c0_4] : memref<1x128xf32, #tpu.memory_space<vmem>>, vector<1x128xf32>
    %5 = vector.broadcast %4 : vector<1x128xf32> to vector<256x128xf32>
    %6 = arith.addf %3, %5 : vector<256x128xf32>
    %cst = arith.constant 1.000000e-01 : f32
    %7 = vector.broadcast %cst : f32 to vector<256x128xf32>
    %8 = arith.mulf %7, %6 : vector<256x128xf32>
    %9 = arith.maximumf %6, %8 : vector<256x128xf32>
    %c0_5 = arith.constant 0 : index
    %c0_6 = arith.constant 0 : index
    %10 = vector.load %arg4[%c0_5, %c0_6] : memref<256x128xf32, #tpu.memory_space<vmem>>, vector<256x128xf32>
    tpu.vector_store %arg4[%c0_5, %c0_6], %9 {strides = array<i32>} : memref<256x128xf32, #tpu.memory_space<vmem>>, vector<256x128xf32>,
    return
  }
  func.func @transform_0(%arg0: i32) -> (i32, i32) {
    %c0_i32 = arith.constant 0 : i32
    %c0_i32_0 = arith.constant 0 : i32
    return %arg0, %c0_i32 : i32, i32
  }
  func.func @transform_1(%arg0: i32) -> (i32, i32) {
    %c0_i32 = arith.constant 0 : i32
    %c0_i32_0 = arith.constant 0 : i32
    %c0_i32_1 = arith.constant 0 : i32
    return %c0_i32, %c0_i32_0 : i32, i32
  }
  func.func @transform_2(%arg0: i32) -> (i32, i32) {
    %c0_i32 = arith.constant 0 : i32
    %c0_i32_0 = arith.constant 0 : i32
    %c0_i32_1 = arith.constant 0 : i32
    return %c0_i32, %c0_i32_0 : i32, i32
  }
  func.func @transform_3(%arg0: i32) -> (i32, i32) {
    %c0_i32 = arith.constant 0 : i32
    %c0_i32_0 = arith.constant 0 : i32
    return %arg0, %c0_i32 : i32, i32
  }
}

</mosaic_0001>

<llo_original>
// kernel: conv_bn_lrelu.3
$region0: #{conv_bn_lrelu.3}
  #allocation0 [shape = 'u32[]', space=smem, size = 0x4, offset = 0x4, fixed_abs, tag = 'smem constant byte address 0x4 - core index']
  #allocation1 [shape = 'u32[144,128]{1,0:T(1,128)}', space=vmem, size = 0x12000, scoped, tag = 'internal scratch']
  %s0 = inlined_call_operand.vmem [shape: f32[512,128], index: 0, kind: input, shape index: {}]
  %s1 = inlined_call_operand.vmem [shape: f32[1,128], index: 1, kind: input, shape index: {}]
  %s2 = inlined_call_operand.vmem [shape: f32[1,128], index: 2, kind: input, shape index: {}]
  %s3 = inlined_call_operand.vmem [shape: f32[512,128], index: 3, kind: output, shape index: {}]
  %s4 = sld [smem:[#allocation0]]
  $region45: #{conv_bn_lrelu.3} parent=0
    _
  %s6 = ssub.s32 1, %s4
  %s7 = scalar_select 0, %s6, %s4
  loop: start=0, step=1, limit=4
  $region2: #{conv_bn_lrelu.3} parent=0 // loop_pre_header
    _
  $region3: #{conv_bn_lrelu.3} parent=0 // loop_header
    %s9 = sphi 0, %s13
    %p10 = scmp.ge.s32.totalorder %s9, 4
    %s19 = sphi 0, %s21
    %s22 = sphi 0, %s19
    %s23 = sphi 0, %s22
    %s39 = sphi 0, %s23
    %s43 = sphi 0, %s43
    %s45 = sphi 0, %s43
    %s46 = sphi 0, %s45
    %s60 = sphi 0, %s46
    %s64 = sphi 0, %s64
    %s66 = sphi 0, %s64
    %s67 = sphi 0, %s66
    %s81 = sphi 0, %s67
    %s87 = sphi 0, %s89
    %s90 = sphi 0, %s87
    %s91 = sphi 0, %s90
    %s107 = sphi 0, %s91
  $region4: #{conv_bn_lrelu.3} parent=0 // loop_header_branch
    %12 = sbr.rel (%p10) target = $region8
  $region5: #{conv_bn_lrelu.3} parent=0 // loop_body
    %s14 = ssub.s32 %s9, 1
    %s15 = ssub.s32 %s9, 2
    %s16 = sadd.s32 %s9, 1
    %s17 = ssub.s32 %s9, %s16
    %p18 = scmp.eq.s32.totalorder %s17, 0
    %s20 = sadd.s32 %s19, 1
    %s21 = scalar_select %p18, %s19, %s20
    %p24 = pneg %p18
    %p25 = scmp.eq.s32.totalorder %s9, 1
    %p26 = por %p24, %p25
    %p27 = scmp.ne.s32.totalorder %s19, %s22
    %p28 = scmp.eq.s32.totalorder %s9, 0
    %p29 = por %p27, %p28
    %p30 = scmp.ne.s32.totalorder %s19, %s22
    %p31 = scmp.eq.s32.totalorder %s14, 1
    %p32 = por %p30, %p31
    %p33 = scmp.ne.s32.totalorder %s22, %s23
    %p34 = scmp.eq.s32.totalorder %s14, 0
    %p35 = por %p33, %p34
    %p36 = scmp.ne.s32.totalorder %s22, %s23
    %p37 = scmp.eq.s32.totalorder %s15, 1
    %p38 = por %p36, %p37
    %p40 = scmp.ne.s32.totalorder %s23, %s39
    %p41 = scmp.eq.s32.totalorder %s15, 0
    %p42 = por %p40, %p41
    %s44 = sadd.s32 %s43, 1
    %p47 = scmp.eq.s32.totalorder %s9, 1
    %p48 = scmp.ne.s32.totalorder %s43, %s45
    %p49 = scmp.eq.s32.totalorder %s9, 0
    %p50 = por %p48, %p49
    %p51 = scmp.ne.s32.totalorder %s43, %s45
    %p52 = scmp.eq.s32.totalorder %s14, 1
    %p53 = por %p51, %p52
    %p54 = scmp.ne.s32.totalorder %s45, %s46
    %p55 = scmp.eq.s32.totalorder %s14, 0
    %p56 = por %p54, %p55
    %p57 = scmp.ne.s32.totalorder %s45, %s46
    %p58 = scmp.eq.s32.totalorder %s15, 1
    %p59 = por %p57, %p58
    %p61 = scmp.ne.s32.totalorder %s46, %s60
    %p62 = scmp.eq.s32.totalorder %s15, 0
    %p63 = por %p61, %p62
    %s65 = sadd.s32 %s64, 1
    %p68 = scmp.eq.s32.totalorder %s9, 1
    %p69 = scmp.ne.s32.totalorder %s64, %s66
    %p70 = scmp.eq.s32.totalorder %s9, 0
    %p71 = por %p69, %p70
    %p72 = scmp.ne.s32.totalorder %s64, %s66
    %p73 = scmp.eq.s32.totalorder %s14, 1
    %p74 = por %p72, %p73
    %p75 = scmp.ne.s32.totalorder %s66, %s67
    %p76 = scmp.eq.s32.totalorder %s14, 0
    %p77 = por %p75, %p76
    %p78 = scmp.ne.s32.totalorder %s66, %s67
    %p79 = scmp.eq.s32.totalorder %s15, 1
    %p80 = por %p78, %p79
    %p82 = scmp.ne.s32.totalorder %s67, %s81
    %p83 = scmp.eq.s32.totalorder %s15, 0
    %p84 = por %p82, %p83
    %s85 = ssub.s32 %s9, %s16
    %p86 = scmp.eq.s32.totalorder %s85, 0
    %s88 = sadd.s32 %s87, 1
    %s89 = scalar_select %p86, %s87, %s88
    %p92 = pneg %p86
    %p93 = scmp.eq.s32.totalorder %s9, 1
    %p94 = por %p92, %p93
    %p95 = scmp.ne.s32.totalorder %s87, %s90
    %p96 = scmp.eq.s32.totalorder %s9, 0
    %p97 = por %p95, %p96
    %p98 = scmp.ne.s32.totalorder %s87, %s90
    %p99 = scmp.eq.s32.totalorder %s14, 1
    %p100 = por %p98, %p99
    %p101 = scmp.ne.s32.totalorder %s90, %s91
    %p102 = scmp.eq.s32.totalorder %s14, 0
    %p103 = por %p101, %p102
    %p104 = scmp.ne.s32.totalorder %s90, %s91
    %p105 = scmp.eq.s32.totalorder %s15, 1
    %p106 = por %p104, %p105
    %p108 = scmp.ne.s32.totalorder %s91, %s107
    %p109 = scmp.eq.s32.totalorder %s15, 0
    %p110 = por %p108, %p109
    %p111 = scmp.le.s32.totalorder 1, %s9
    %p112 = scmp.lt.s32.totalorder %s9, 3
    %p113 = pnand %p111, %p112
    %p114 = pneg %p113
    // Predicated region
    $region9: #{conv_bn_lrelu.3} parent=5 // pred_check
      _
    $region10: #{conv_bn_lrelu.3} parent=5 // pred_check_branch
      %116 = sbr.rel (%p113) target = $region12
    $region11: #{conv_bn_lrelu.3} parent=5 // pred_region
      %s117 = ssub.s32 %s9, 1
      // Predicated region
      $region13: #{conv_bn_lrelu.3} parent=11 // pred_check
        %p118 = pneg %p56
      $region14: #{conv_bn_lrelu.3} parent=11 // pred_check_branch
        %120 = sbr.rel (%p118) target = $region16
      $region15: #{conv_bn_lrelu.3} parent=11 // pred_region
        _
      $region16: #{conv_bn_lrelu.3} parent=11 // pred_fallthru
        _
      // Predicated region
      $region17: #{conv_bn_lrelu.3} parent=11 // pred_check
        %p121 = pneg %p77
      $region18: #{conv_bn_lrelu.3} parent=11 // pred_check_branch
        %123 = sbr.rel (%p121) target = $region20
      $region19: #{conv_bn_lrelu.3} parent=11 // pred_region
        _
      $region20: #{conv_bn_lrelu.3} parent=11 // pred_fallthru
        _
    $region12: #{conv_bn_lrelu.3} parent=5 // pred_fallthru
      _
    %p124 = scmp.lt.s32.totalorder %s9, 2
    // Predicated region
    $region21: #{conv_bn_lrelu.3} parent=5 // pred_check
      %p125 = pneg %p124
    $region22: #{conv_bn_lrelu.3} parent=5 // pred_check_branch
      %127 = sbr.rel (%p125) target = $region24
    $region23: #{conv_bn_lrelu.3} parent=5 // pred_region
      // Predicated region
      $region25: #{conv_bn_lrelu.3} parent=23 // pred_check
        %p128 = pneg %p29
      $region26: #{conv_bn_lrelu.3} parent=23 // pred_check_branch
        %130 = sbr.rel (%p128) target = $region28
      $region27: #{conv_bn_lrelu.3} parent=23 // pred_region
        %s131 = smul.u32 32, %s9
        %p132 = scmp.lt.s32.totalorder %s131, 63
        %s133 = scalar_select %p132, %s131, 63
        %s134 = smul.addr %s133, 8
        %s135 = scalar_lea.vmem %s0, %s134
        %s136 = smul.u32 32, %s9
      $region28: #{conv_bn_lrelu.3} parent=23 // pred_fallthru
        _
    $region24: #{conv_bn_lrelu.3} parent=5 // pred_fallthru
      _
    %p137 = scmp.le.s32.totalorder 1, %s9
    %p138 = scmp.lt.s32.totalorder %s9, 3
    %p139 = pnand %p137, %p138
    %p140 = pneg %p139
    // Predicated region
    $region29: #{conv_bn_lrelu.3} parent=5 // pred_check
      _
    $region30: #{conv_bn_lrelu.3} parent=5 // pred_check_branch
      %142 = sbr.rel (%p139) target = $region32
    $region31: #{conv_bn_lrelu.3} parent=5 // pred_region
      %s143 = ssub.s32 %s9, 1
      %s144 = smul.u32 32, %s14
      %p145 = scmp.lt.s32.totalorder %s144, 63
      %s146 = scalar_select %p145, %s144, 63
      %s147 = smul.addr %s146, 8
      %s148 = scalar_lea.vmem %s0, %s147
      %p149 = pneg %p35
      %p150 = pneg %p32
      %p151 = pneg %p56
      %p152 = pneg %p53
      %p153 = pneg %p77
      %p154 = pneg %p74
      %p155 = pneg %p103
      %p156 = pneg %p100
      %s157 = smul.u32 32, %s14
      %p158 = scmp.lt.s32.totalorder %s157, 63
      %s159 = scalar_select %p158, %s157, 63
      %s160 = smul.addr %s159, 8
      %s161 = scalar_lea.vmem %s3, %s160
      %s162 = smul.u32 32, %s14
      %p163 = scmp.lt.s32.totalorder %s162, 63
      %s164 = scalar_select %p163, %s162, 63
      %s165 = smul.addr %s164, 8
      %s166 = scalar_lea.vmem %s0, %s165
      %s167 = smul.u32 32, %s14
      %s168 = smul.u32 32, %s14
      %p169 = scmp.lt.s32.totalorder %s168, 63
      %s170 = scalar_select %p169, %s168, 63
      %s171 = smul.addr %s170, 8
      %s172 = scalar_lea.vmem %s3, %s171
      %s173 = smul.u32 32, %s14
      %v174 = vld [vmem:[%s166] sm:$0xff]
      %v175 = vld [vmem:[%s166 + $0x8] sm:$0xff]
      %v176 = vld [vmem:[%s166 + $0x10] sm:$0xff]
      %v177 = vld [vmem:[%s166 + $0x18] sm:$0xff]
      %v178 = vld [vmem:[%s166 + $0x20] sm:$0xff]
      %v179 = vld [vmem:[%s166 + $0x28] sm:$0xff]
      %v180 = vld [vmem:[%s166 + $0x30] sm:$0xff]
      %v181 = vld [vmem:[%s166 + $0x38] sm:$0xff]
      %v182 = vld [vmem:[%s166 + $0x40] sm:$0xff]
      %v183 = vld [vmem:[%s166 + $0x48] sm:$0xff]
      %v184 = vld [vmem:[%s166 + $0x50] sm:$0xff]
      %v185 = vld [vmem:[%s166 + $0x58] sm:$0xff]
      %v186 = vld [vmem:[%s166 + $0x60] sm:$0xff]
      %v187 = vld [vmem:[%s166 + $0x68] sm:$0xff]
      %v188 = vld [vmem:[%s166 + $0x70] sm:$0xff]
      %v189 = vld [vmem:[%s166 + $0x78] sm:$0xff]
      %v190 = vld [vmem:[%s166 + $0x80] sm:$0xff]
      %v191 = vld [vmem:[%s166 + $0x88] sm:$0xff]
      %v192 = vld [vmem:[%s166 + $0x90] sm:$0xff]
      %v193 = vld [vmem:[%s166 + $0x98] sm:$0xff]
      %v194 = vld [vmem:[%s166 + $0xa0] sm:$0xff]
      %v195 = vld [vmem:[%s166 + $0xa8] sm:$0xff]
      %v196 = vld [vmem:[%s166 + $0xb0] sm:$0xff]
      %v197 = vld [vmem:[%s166 + $0xb8] sm:$0xff]
      %v198 = vld [vmem:[%s166 + $0xc0] sm:$0xff]
      %v199 = vld [vmem:[%s166 + $0xc8] sm:$0xff]
      %v200 = vld [vmem:[%s166 + $0xd0] sm:$0xff]
      %v201 = vld [vmem:[%s166 + $0xd8] sm:$0xff]
      %v202 = vld [vmem:[%s166 + $0xe0] sm:$0xff]
      %v203 = vld [vmem:[%s166 + $0xe8] sm:$0xff]
      %v204 = vld [vmem:[%s166 + $0xf0] sm:$0xff]
      %v205 = vld [vmem:[%s166 + $0xf8] sm:$0xff]
      %v206 = vld [vmem:[%s1] sm:$0x1]
      %v208 = vlaneseq
      %v209 = vshrl.u32 %v208, 7
      %v210 = vsub.s32 0, %v209
      %v211 = vrot.slane %v206, %v210
      %v213 = vmul.f32 %v174, %v211
      %v214 = vmul.f32 %v175, %v211
      %v215 = vmul.f32 %v176, %v211
      %v216 = vmul.f32 %v177, %v211
      %v217 = vmul.f32 %v178, %v211
      %v218 = vmul.f32 %v179, %v211
      %v219 = vmul.f32 %v180, %v211
      %v220 = vmul.f32 %v181, %v211
      %v221 = vmul.f32 %v182, %v211
      %v222 = vmul.f32 %v183, %v211
      %v223 = vmul.f32 %v184, %v211
      %v224 = vmul.f32 %v185, %v211
      %v225 = vmul.f32 %v186, %v211
      %v226 = vmul.f32 %v187, %v211
      %v227 = vmul.f32 %v188, %v211
      %v228 = vmul.f32 %v189, %v211
      %v229 = vmul.f32 %v190, %v211
      %v230 = vmul.f32 %v191, %v211
      %v231 = vmul.f32 %v192, %v211
      %v232 = vmul.f32 %v193, %v211
      %v233 = vmul.f32 %v194, %v211
      %v234 = vmul.f32 %v195, %v211
      %v235 = vmul.f32 %v196, %v211
      %v236 = vmul.f32 %v197, %v211
      %v237 = vmul.f32 %v198, %v211
      %v238 = vmul.f32 %v199, %v211
      %v239 = vmul.f32 %v200, %v211
      %v240 = vmul.f32 %v201, %v211
      %v241 = vmul.f32 %v202, %v211
      %v242 = vmul.f32 %v203, %v211
      %v243 = vmul.f32 %v204, %v211
      %v244 = vmul.f32 %v205, %v211
      %v245 = vld [vmem:[%s2] sm:$0x1]
      %v247 = vlaneseq
      %v248 = vshrl.u32 %v247, 7
      %v249 = vsub.s32 0, %v248
      %v250 = vrot.slane %v245, %v249
      %v252 = vadd.f32 %v213, %v250
      %v253 = vadd.f32 %v214, %v250
      %v254 = vadd.f32 %v215, %v250
      %v255 = vadd.f32 %v216, %v250
      %v256 = vadd.f32 %v217, %v250
      %v257 = vadd.f32 %v218, %v250
      %v258 = vadd.f32 %v219, %v250
      %v259 = vadd.f32 %v220, %v250
      %v260 = vadd.f32 %v221, %v250
      %v261 = vadd.f32 %v222, %v250
      %v262 = vadd.f32 %v223, %v250
      %v263 = vadd.f32 %v224, %v250
      %v264 = vadd.f32 %v225, %v250
      %v265 = vadd.f32 %v226, %v250
      %v266 = vadd.f32 %v227, %v250
      %v267 = vadd.f32 %v228, %v250
      %v268 = vadd.f32 %v229, %v250
      %v269 = vadd.f32 %v230, %v250
      %v270 = vadd.f32 %v231, %v250
      %v271 = vadd.f32 %v232, %v250
      %v272 = vadd.f32 %v233, %v250
      %v273 = vadd.f32 %v234, %v250
      %v274 = vadd.f32 %v235, %v250
      %v275 = vadd.f32 %v236, %v250
      %v276 = vadd.f32 %v237, %v250
      %v277 = vadd.f32 %v238, %v250
      %v278 = vadd.f32 %v239, %v250
      %v279 = vadd.f32 %v240, %v250
      %v280 = vadd.f32 %v241, %v250
      %v281 = vadd.f32 %v242, %v250
      %v282 = vadd.f32 %v243, %v250
      %v283 = vadd.f32 %v244, %v250
      %v284 = vmul.f32 %v252, 0.1
      %v285 = vmul.f32 %v253, 0.1
      %v286 = vmul.f32 %v254, 0.1
      %v287 = vmul.f32 %v255, 0.1
      %v288 = vmul.f32 %v256, 0.1
      %v289 = vmul.f32 %v257, 0.1
      %v290 = vmul.f32 %v258, 0.1
      %v291 = vmul.f32 %v259, 0.1
      %v292 = vmul.f32 %v260, 0.1
      %v293 = vmul.f32 %v261, 0.1
      %v294 = vmul.f32 %v262, 0.1
      %v295 = vmul.f32 %v263, 0.1
      %v296 = vmul.f32 %v264, 0.1
      %v297 = vmul.f32 %v265, 0.1
      %v298 = vmul.f32 %v266, 0.1
      %v299 = vmul.f32 %v267, 0.1
      %v300 = vmul.f32 %v268, 0.1
      %v301 = vmul.f32 %v269, 0.1
      %v302 = vmul.f32 %v270, 0.1
      %v303 = vmul.f32 %v271, 0.1
      %v304 = vmul.f32 %v272, 0.1
      %v305 = vmul.f32 %v273, 0.1
      %v306 = vmul.f32 %v274, 0.1
      %v307 = vmul.f32 %v275, 0.1
      %v308 = vmul.f32 %v276, 0.1
      %v309 = vmul.f32 %v277, 0.1
      %v310 = vmul.f32 %v278, 0.1
      %v311 = vmul.f32 %v279, 0.1
      %v312 = vmul.f32 %v280, 0.1
      %v313 = vmul.f32 %v281, 0.1
      %v314 = vmul.f32 %v282, 0.1
      %v315 = vmul.f32 %v283, 0.1
      %v316 = vmax.f32 %v252, %v284
      %v317 = vmax.f32 %v253, %v285
      %v318 = vmax.f32 %v254, %v286
      %v319 = vmax.f32 %v255, %v287
      %v320 = vmax.f32 %v256, %v288
      %v321 = vmax.f32 %v257, %v289
      %v322 = vmax.f32 %v258, %v290
      %v323 = vmax.f32 %v259, %v291
      %v324 = vmax.f32 %v260, %v292
      %v325 = vmax.f32 %v261, %v293
      %v326 = vmax.f32 %v262, %v294
      %v327 = vmax.f32 %v263, %v295
      %v328 = vmax.f32 %v264, %v296
      %v329 = vmax.f32 %v265, %v297
      %v330 = vmax.f32 %v266, %v298
      %v331 = vmax.f32 %v267, %v299
      %v332 = vmax.f32 %v268, %v300
      %v333 = vmax.f32 %v269, %v301
      %v334 = vmax.f32 %v270, %v302
      %v335 = vmax.f32 %v271, %v303
      %v336 = vmax.f32 %v272, %v304
      %v337 = vmax.f32 %v273, %v305
      %v338 = vmax.f32 %v274, %v306
      %v339 = vmax.f32 %v275, %v307
      %v340 = vmax.f32 %v276, %v308
      %v341 = vmax.f32 %v277, %v309
      %v342 = vmax.f32 %v278, %v310
      %v343 = vmax.f32 %v279, %v311
      %v344 = vmax.f32 %v280, %v312
      %v345 = vmax.f32 %v281, %v313
      %v346 = vmax.f32 %v282, %v314
      %v347 = vmax.f32 %v283, %v315
      %348 = vst [vmem:[%s172] sm:$0xff] %v316
      %349 = vst [vmem:[%s172 + $0x8] sm:$0xff] %v317
      %350 = vst [vmem:[%s172 + $0x10] sm:$0xff] %v318
      %351 = vst [vmem:[%s172 + $0x18] sm:$0xff] %v319
      %352 = vst [vmem:[%s172 + $0x20] sm:$0xff] %v320
      %353 = vst [vmem:[%s172 + $0x28] sm:$0xff] %v321
      %354 = vst [vmem:[%s172 + $0x30] sm:$0xff] %v322
      %355 = vst [vmem:[%s172 + $0x38] sm:$0xff] %v323
      %356 = vst [vmem:[%s172 + $0x40] sm:$0xff] %v324
      %357 = vst [vmem:[%s172 + $0x48] sm:$0xff] %v325
      %358 = vst [vmem:[%s172 + $0x50] sm:$0xff] %v326
      %359 = vst [vmem:[%s172 + $0x58] sm:$0xff] %v327
      %360 = vst [vmem:[%s172 + $0x60] sm:$0xff] %v328
      %361 = vst [vmem:[%s172 + $0x68] sm:$0xff] %v329
      %362 = vst [vmem:[%s172 + $0x70] sm:$0xff] %v330
      %363 = vst [vmem:[%s172 + $0x78] sm:$0xff] %v331
      %364 = vst [vmem:[%s172 + $0x80] sm:$0xff] %v332
      %365 = vst [vmem:[%s172 + $0x88] sm:$0xff] %v333
      %366 = vst [vmem:[%s172 + $0x90] sm:$0xff] %v334
      %367 = vst [vmem:[%s172 + $0x98] sm:$0xff] %v335
      %368 = vst [vmem:[%s172 + $0xa0] sm:$0xff] %v336
      %369 = vst [vmem:[%s172 + $0xa8] sm:$0xff] %v337
      %370 = vst [vmem:[%s172 + $0xb0] sm:$0xff] %v338
      %371 = vst [vmem:[%s172 + $0xb8] sm:$0xff] %v339
      %372 = vst [vmem:[%s172 + $0xc0] sm:$0xff] %v340
      %373 = vst [vmem:[%s172 + $0xc8] sm:$0xff] %v341
      %374 = vst [vmem:[%s172 + $0xd0] sm:$0xff] %v342
      %375 = vst [vmem:[%s172 + $0xd8] sm:$0xff] %v343
      %376 = vst [vmem:[%s172 + $0xe0] sm:$0xff] %v344
      %377 = vst [vmem:[%s172 + $0xe8] sm:$0xff] %v345
      %378 = vst [vmem:[%s172 + $0xf0] sm:$0xff] %v346
      %379 = vst [vmem:[%s172 + $0xf8] sm:$0xff] %v347
      %s380 = smul.u32 32, %s14
      %p381 = scmp.lt.s32.totalorder %s380, 63
      %s382 = scalar_select %p381, %s380, 63
      %s383 = smul.addr %s382, 8
      %s384 = scalar_lea.vmem %s3, %s383
      // Predicated region
      $region33: #{conv_bn_lrelu.3} parent=31 // pred_check
        %p385 = pneg %p100
      $region34: #{conv_bn_lrelu.3} parent=31 // pred_check_branch
        %387 = sbr.rel (%p385) target = $region36
      $region35: #{conv_bn_lrelu.3} parent=31 // pred_region
        %s388 = smul.u32 32, %s14
      $region36: #{conv_bn_lrelu.3} parent=31 // pred_fallthru
        _
    $region32: #{conv_bn_lrelu.3} parent=5 // pred_fallthru
      _
    %p389 = scmp.le.s32.totalorder 2, %s9
    // Predicated region
    $region37: #{conv_bn_lrelu.3} parent=5 // pred_check
      %p390 = pneg %p389
    $region38: #{conv_bn_lrelu.3} parent=5 // pred_check_branch
      %392 = sbr.rel (%p390) target = $region40
    $region39: #{conv_bn_lrelu.3} parent=5 // pred_region
      %s393 = ssub.s32 %s9, 2
      // Predicated region
      $region41: #{conv_bn_lrelu.3} parent=39 // pred_check
        %p394 = pneg %p106
      $region42: #{conv_bn_lrelu.3} parent=39 // pred_check_branch
        %396 = sbr.rel (%p394) target = $region44
      $region43: #{conv_bn_lrelu.3} parent=39 // pred_region
        %s397 = smul.u32 32, %s15
        %p398 = scmp.lt.s32.totalorder %s397, 63
        %s399 = scalar_select %p398, %s397, 63
        %s400 = smul.addr %s399, 8
        %s401 = scalar_lea.vmem %s3, %s400
      $region44: #{conv_bn_lrelu.3} parent=39 // pred_fallthru
        _
    $region40: #{conv_bn_lrelu.3} parent=5 // pred_fallthru
      _
  $region6: #{conv_bn_lrelu.3} parent=0 // loop_footer
    %s13 = sadd.s32 1, %s9
  $region7: #{conv_bn_lrelu.3} parent=0 // loop_footer_branch
    %8 = sbr.rel target = $region3
  $region8: #{conv_bn_lrelu.3} parent=0 // loop_exit
    _

// kernel: conv_bn_lrelu.2
$region0: #{conv_bn_lrelu.2}
  #allocation0 [shape = 'u32[]', space=smem, size = 0x4, offset = 0x4, fixed_abs, tag = 'smem constant byte address 0x4 - core index']
  #allocation1 [shape = 'u32[144,128]{1,0:T(1,128)}', space=vmem, size = 0x12000, scoped, tag = 'internal scratch']
  %s0 = inlined_call_operand.vmem [shape: bf16[512,36], index: 0, kind: input, shape index: {}]
  %s1 = inlined_call_operand.vmem [shape: bf16[36,128], index: 1, kind: input, shape index: {}]
  %s2 = inlined_call_operand.vmem [shape: f32[512,128], index: 2, kind: output, shape index: {0}]
  %s3 = inlined_call_operand.vmem [shape: f32[2,2,128], index: 3, kind: output, shape index: {1}]
  %4 = xla_tuple %s2, %s3
  %s5 = sld [smem:[#allocation0]]
  $region49: #{conv_bn_lrelu.2} parent=0
    _
  %s7 = ssub.s32 1, %s5
  %s8 = scalar_select 0, %s7, %s5
  loop: start=0, step=1, limit=4
  $region2: #{conv_bn_lrelu.2} parent=0 // loop_pre_header
    _
  $region3: #{conv_bn_lrelu.2} parent=0 // loop_header
    %s10 = sphi 0, %s14
    %p11 = scmp.ge.s32.totalorder %s10, 4
    %s20 = sphi 0, %s22
    %s23 = sphi 0, %s20
    %s24 = sphi 0, %s23
    %s40 = sphi 0, %s24
    %s44 = sphi 0, %s44
    %s46 = sphi 0, %s44
    %s47 = sphi 0, %s46
    %s61 = sphi 0, %s47
    %s67 = sphi 0, %s69
    %s70 = sphi 0, %s67
    %s71 = sphi 0, %s70
    %s87 = sphi 0, %s71
    %s93 = sphi 0, %s95
    %s96 = sphi 0, %s93
    %s97 = sphi 0, %s96
    %s113 = sphi 0, %s97
  $region4: #{conv_bn_lrelu.2} parent=0 // loop_header_branch
    %13 = sbr.rel (%p11) target = $region8
  $region5: #{conv_bn_lrelu.2} parent=0 // loop_body
    %s15 = ssub.s32 %s10, 1
    %s16 = ssub.s32 %s10, 2
    %s17 = sadd.s32 %s10, 1
    %s18 = ssub.s32 %s10, %s17
    %p19 = scmp.eq.s32.totalorder %s18, 0
    %s21 = sadd.s32 %s20, 1
    %s22 = scalar_select %p19, %s20, %s21
    %p25 = pneg %p19
    %p26 = scmp.eq.s32.totalorder %s10, 1
    %p27 = por %p25, %p26
    %p28 = scmp.ne.s32.totalorder %s20, %s23
    %p29 = scmp.eq.s32.totalorder %s10, 0
    %p30 = por %p28, %p29
    %p31 = scmp.ne.s32.totalorder %s20, %s23
    %p32 = scmp.eq.s32.totalorder %s15, 1
    %p33 = por %p31, %p32
    %p34 = scmp.ne.s32.totalorder %s23, %s24
    %p35 = scmp.eq.s32.totalorder %s15, 0
    %p36 = por %p34, %p35
    %p37 = scmp.ne.s32.totalorder %s23, %s24
    %p38 = scmp.eq.s32.totalorder %s16, 1
    %p39 = por %p37, %p38
    %p41 = scmp.ne.s32.totalorder %s24, %s40
    %p42 = scmp.eq.s32.totalorder %s16, 0
    %p43 = por %p41, %p42
    %s45 = sadd.s32 %s44, 1
    %p48 = scmp.eq.s32.totalorder %s10, 1
    %p49 = scmp.ne.s32.totalorder %s44, %s46
    %p50 = scmp.eq.s32.totalorder %s10, 0
    %p51 = por %p49, %p50
    %p52 = scmp.ne.s32.totalorder %s44, %s46
    %p53 = scmp.eq.s32.totalorder %s15, 1
    %p54 = por %p52, %p53
    %p55 = scmp.ne.s32.totalorder %s46, %s47
    %p56 = scmp.eq.s32.totalorder %s15, 0
    %p57 = por %p55, %p56
    %p58 = scmp.ne.s32.totalorder %s46, %s47
    %p59 = scmp.eq.s32.totalorder %s16, 1
    %p60 = por %p58, %p59
    %p62 = scmp.ne.s32.totalorder %s47, %s61
    %p63 = scmp.eq.s32.totalorder %s16, 0
    %p64 = por %p62, %p63
    %s65 = ssub.s32 %s10, %s17
    %p66 = scmp.eq.s32.totalorder %s65, 0
    %s68 = sadd.s32 %s67, 1
    %s69 = scalar_select %p66, %s67, %s68
    %p72 = pneg %p66
    %p73 = scmp.eq.s32.totalorder %s10, 1
    %p74 = por %p72, %p73
    %p75 = scmp.ne.s32.totalorder %s67, %s70
    %p76 = scmp.eq.s32.totalorder %s10, 0
    %p77 = por %p75, %p76
    %p78 = scmp.ne.s32.totalorder %s67, %s70
    %p79 = scmp.eq.s32.totalorder %s15, 1
    %p80 = por %p78, %p79
    %p81 = scmp.ne.s32.totalorder %s70, %s71
    %p82 = scmp.eq.s32.totalorder %s15, 0
    %p83 = por %p81, %p82
    %p84 = scmp.ne.s32.totalorder %s70, %s71
    %p85 = scmp.eq.s32.totalorder %s16, 1
    %p86 = por %p84, %p85
    %p88 = scmp.ne.s32.totalorder %s71, %s87
    %p89 = scmp.eq.s32.totalorder %s16, 0
    %p90 = por %p88, %p89
    %s91 = ssub.s32 %s10, %s17
    %p92 = scmp.eq.s32.totalorder %s91, 0
    %s94 = sadd.s32 %s93, 1
    %s95 = scalar_select %p92, %s93, %s94
    %p98 = pneg %p92
    %p99 = scmp.eq.s32.totalorder %s10, 1
    %p100 = por %p98, %p99
    %p101 = scmp.ne.s32.totalorder %s93, %s96
    %p102 = scmp.eq.s32.totalorder %s10, 0
    %p103 = por %p101, %p102
    %p104 = scmp.ne.s32.totalorder %s93, %s96
    %p105 = scmp.eq.s32.totalorder %s15, 1
    %p106 = por %p104, %p105
    %p107 = scmp.ne.s32.totalorder %s96, %s97
    %p108 = scmp.eq.s32.totalorder %s15, 0
    %p109 = por %p107, %p108
    %p110 = scmp.ne.s32.totalorder %s96, %s97
    %p111 = scmp.eq.s32.totalorder %s16, 1
    %p112 = por %p110, %p111
    %p114 = scmp.ne.s32.totalorder %s97, %s113
    %p115 = scmp.eq.s32.totalorder %s16, 0
    %p116 = por %p114, %p115
    %p117 = scmp.le.s32.totalorder 1, %s10
    %p118 = scmp.lt.s32.totalorder %s10, 3
    %p119 = pnand %p117, %p118
    %p120 = pneg %p119
    // Predicated region
    $region9: #{conv_bn_lrelu.2} parent=5 // pred_check
      _
    $region10: #{conv_bn_lrelu.2} parent=5 // pred_check_branch
      %122 = sbr.rel (%p119) target = $region12
    $region11: #{conv_bn_lrelu.2} parent=5 // pred_region
      %s123 = ssub.s32 %s10, 1
      // Predicated region
      $region13: #{conv_bn_lrelu.2} parent=11 // pred_check
        %p124 = pneg %p57
      $region14: #{conv_bn_lrelu.2} parent=11 // pred_check_branch
        %126 = sbr.rel (%p124) target = $region16
      $region15: #{conv_bn_lrelu.2} parent=11 // pred_region
        _
      $region16: #{conv_bn_lrelu.2} parent=11 // pred_fallthru
        _
    $region12: #{conv_bn_lrelu.2} parent=5 // pred_fallthru
      _
    %p127 = scmp.lt.s32.totalorder %s10, 2
    // Predicated region
    $region17: #{conv_bn_lrelu.2} parent=5 // pred_check
      %p128 = pneg %p127
    $region18: #{conv_bn_lrelu.2} parent=5 // pred_check_branch
      %130 = sbr.rel (%p128) target = $region20
    $region19: #{conv_bn_lrelu.2} parent=5 // pred_region
      // Predicated region
      $region21: #{conv_bn_lrelu.2} parent=19 // pred_check
        %p131 = pneg %p30
      $region22: #{conv_bn_lrelu.2} parent=19 // pred_check_branch
        %133 = sbr.rel (%p131) target = $region24
      $region23: #{conv_bn_lrelu.2} parent=19 // pred_region
        %s134 = smul.u32 32, %s10
        %p135 = scmp.lt.s32.totalorder %s134, 63
        %s136 = scalar_select %p135, %s134, 63
        %s137 = smul.addr %s136, 4
        %s138 = scalar_lea.vmem %s0, %s137
        %s139 = smul.u32 32, %s10
      $region24: #{conv_bn_lrelu.2} parent=19 // pred_fallthru
        _
    $region20: #{conv_bn_lrelu.2} parent=5 // pred_fallthru
      _
    %p140 = scmp.le.s32.totalorder 1, %s10
    %p141 = scmp.lt.s32.totalorder %s10, 3
    %p142 = pnand %p140, %p141
    %p143 = pneg %p142
    // Predicated region
    $region25: #{conv_bn_lrelu.2} parent=5 // pred_check
      _
    $region26: #{conv_bn_lrelu.2} parent=5 // pred_check_branch
      %145 = sbr.rel (%p142) target = $region28
    $region27: #{conv_bn_lrelu.2} parent=5 // pred_region
      %s146 = ssub.s32 %s10, 1
      %s147 = smul.u32 32, %s15
      %p148 = scmp.lt.s32.totalorder %s147, 63
      %s149 = scalar_select %p148, %s147, 63
      %s150 = smul.addr %s149, 4
      %s151 = scalar_lea.vmem %s0, %s150
      %p152 = pneg %p36
      %p153 = pneg %p33
      %p154 = pneg %p57
      %p155 = pneg %p54
      %p156 = pneg %p83
      %p157 = pneg %p80
      %s158 = smul.u32 32, %s15
      %p159 = scmp.lt.s32.totalorder %s158, 63
      %s160 = scalar_select %p159, %s158, 63
      %s161 = smul.addr %s160, 8
      %s162 = scalar_lea.vmem %s2, %s161
      %p163 = pneg %p109
      %p164 = pneg %p106
      %p165 = scmp.lt.s32.totalorder %s15, 1
      %s166 = scalar_select %p165, %s15, 1
      %s167 = smul.addr %s166, 2
      %s168 = scalar_lea.vmem %s3, %s167
      %s169 = smul.u32 32, %s15
      %p170 = scmp.lt.s32.totalorder %s169, 63
      %s171 = scalar_select %p170, %s169, 63
      %s172 = smul.addr %s171, 4
      %s173 = scalar_lea.vmem %s0, %s172
      %s174 = smul.u32 32, %s15
      %s175 = smul.u32 32, %s15
      %p176 = scmp.lt.s32.totalorder %s175, 63
      %s177 = scalar_select %p176, %s175, 63
      %s178 = smul.addr %s177, 8
      %s179 = scalar_lea.vmem %s2, %s178
      %s180 = smul.u32 32, %s15
      %p181 = scmp.lt.s32.totalorder %s15, 1
      %s182 = scalar_select %p181, %s15, 1
      %s183 = smul.addr %s182, 2
      %s184 = scalar_lea.vmem %s3, %s183
      %v186 = vld [vmem:[%s173] sm:$0xf]
      %v187 = vld [vmem:[%s173 + $0x4] sm:$0xf]
      %v188 = vld [vmem:[%s173 + $0x8] sm:$0xf]
      %v189 = vld [vmem:[%s173 + $0xc] sm:$0xf]
      %v190 = vld [vmem:[%s173 + $0x10] sm:$0xf]
      %v191 = vld [vmem:[%s173 + $0x14] sm:$0xf]
      %v192 = vld [vmem:[%s173 + $0x18] sm:$0xf]
      %v193 = vld [vmem:[%s173 + $0x1c] sm:$0xf]
      %v194 = vld [vmem:[%s173 + $0x20] sm:$0xf]
      %v195 = vld [vmem:[%s173 + $0x24] sm:$0xf]
      %v196 = vld [vmem:[%s173 + $0x28] sm:$0xf]
      %v197 = vld [vmem:[%s173 + $0x2c] sm:$0xf]
      %v198 = vld [vmem:[%s173 + $0x30] sm:$0xf]
      %v199 = vld [vmem:[%s173 + $0x34] sm:$0xf]
      %v200 = vld [vmem:[%s173 + $0x38] sm:$0xf]
      %v201 = vld [vmem:[%s173 + $0x3c] sm:$0xf]
      %v202 = vld [vmem:[%s173 + $0x40] sm:$0xf]
      %v203 = vld [vmem:[%s173 + $0x44] sm:$0xf]
      %v204 = vld [vmem:[%s173 + $0x48] sm:$0xf]
      %v205 = vld [vmem:[%s173 + $0x4c] sm:$0xf]
      %v206 = vld [vmem:[%s173 + $0x50] sm:$0xf]
      %v207 = vld [vmem:[%s173 + $0x54] sm:$0xf]
      %v208 = vld [vmem:[%s173 + $0x58] sm:$0xf]
      %v209 = vld [vmem:[%s173 + $0x5c] sm:$0xf]
      %v210 = vld [vmem:[%s173 + $0x60] sm:$0xf]
      %v211 = vld [vmem:[%s173 + $0x64] sm:$0xf]
      %v212 = vld [vmem:[%s173 + $0x68] sm:$0xf]
      %v213 = vld [vmem:[%s173 + $0x6c] sm:$0xf]
      %v214 = vld [vmem:[%s173 + $0x70] sm:$0xf]
      %v215 = vld [vmem:[%s173 + $0x74] sm:$0xf]
      %v216 = vld [vmem:[%s173 + $0x78] sm:$0xf]
      %v217 = vld [vmem:[%s173 + $0x7c] sm:$0xf]
      %v218 = vld [vmem:[%s1] sm:$0xf]
      %v219 = vld [vmem:[%s1 + $0x4] sm:$0xf]
      %v220 = vld [vmem:[%s1 + $0x8] sm:$0xf]
      %v221 = vld [vmem:[%s1 + $0xc] sm:$0xf]
      %v222 = vld [vmem:[%s1 + $0x10] sm:$0x3]
      %v255 = vunpack.c.l.b16 %v186
      %v256 = vunpack.c.l.b16 %v187
      %v257 = vunpack.c.l.b16 %v188
      %v258 = vunpack.c.l.b16 %v189
      %v259 = vunpack.c.l.b16 %v190
      %v260 = vunpack.c.l.b16 %v191
      %v261 = vunpack.c.l.b16 %v192
      %v262 = vunpack.c.l.b16 %v193
      %v263 = vunpack.c.l.b16 %v194
      %v264 = vunpack.c.l.b16 %v195
      %v265 = vunpack.c.l.b16 %v196
      %v266 = vunpack.c.l.b16 %v197
      %v267 = vunpack.c.l.b16 %v198
      %v268 = vunpack.c.l.b16 %v199
      %v269 = vunpack.c.l.b16 %v200
      %v270 = vunpack.c.l.b16 %v201
      %v271 = vunpack.c.l.b16 %v202
      %v272 = vunpack.c.l.b16 %v203
      %v273 = vunpack.c.l.b16 %v204
      %v274 = vunpack.c.l.b16 %v205
      %v275 = vunpack.c.l.b16 %v206
      %v276 = vunpack.c.l.b16 %v207
      %v277 = vunpack.c.l.b16 %v208
      %v278 = vunpack.c.l.b16 %v209
      %v279 = vunpack.c.l.b16 %v210
      %v280 = vunpack.c.l.b16 %v211
      %v281 = vunpack.c.l.b16 %v212
      %v282 = vunpack.c.l.b16 %v213
      %v283 = vunpack.c.l.b16 %v214
      %v284 = vunpack.c.l.b16 %v215
      %v285 = vunpack.c.l.b16 %v216
      %v286 = vunpack.c.l.b16 %v217
      %v287 = vpack.c.b16 %v256, %v255
      %v288 = vpack.c.b16 %v258, %v257
      %v289 = vpack.c.b16 %v260, %v259
      %v290 = vpack.c.b16 %v262, %v261
      %v291 = vpack.c.b16 %v264, %v263
      %v292 = vpack.c.b16 %v266, %v265
      %v293 = vpack.c.b16 %v268, %v267
      %v294 = vpack.c.b16 %v270, %v269
      %v295 = vpack.c.b16 %v272, %v271
      %v296 = vpack.c.b16 %v274, %v273
      %v297 = vpack.c.b16 %v276, %v275
      %v298 = vpack.c.b16 %v278, %v277
      %v299 = vpack.c.b16 %v280, %v279
      %v300 = vpack.c.b16 %v282, %v281
      %v301 = vpack.c.b16 %v284, %v283
      %v302 = vpack.c.b16 %v286, %v285
      %v308 = vunpack.c.l.b16 %v218
      %v309 = vunpack.c.l.b16 %v219
      %v310 = vunpack.c.l.b16 %v220
      %v311 = vunpack.c.l.b16 %v221
      %v312 = vunpack.c.l.b16 %v222
      %v313 = vpack.c.b16 %v309, %v308
      %v314 = vpack.c.b16 %v311, %v310
      %v315 = vpack.c.b16 %v312, %v312
      %vm318 = vcmask 293888
      %v320 = vsel %vm318, %v287, 0
      %v323 = vsel %vm318, %v288, 0
      %v326 = vsel %vm318, %v289, 0
      %v329 = vsel %vm318, %v290, 0
      %v332 = vsel %vm318, %v291, 0
      %v335 = vsel %vm318, %v292, 0
      %v338 = vsel %vm318, %v293, 0
      %v341 = vsel %vm318, %v294, 0
      %v344 = vsel %vm318, %v295, 0
      %v347 = vsel %vm318, %v296, 0
      %v350 = vsel %vm318, %v297, 0
      %v353 = vsel %vm318, %v298, 0
      %v356 = vsel %vm318, %v299, 0
      %v359 = vsel %vm318, %v300, 0
      %v362 = vsel %vm318, %v301, 0
      %v365 = vsel %vm318, %v302, 0
      %vm367 = vcmask 1041408
      %v369 = vsel %vm367, %v315, 0
      %371 = vmatprep.subr.bf16.mxu0 0
      %372 = vmatpush1.bf16.msra.mxu0 0
      %373 = vmatprep.subr.bf16.mxu0 0
      %374 = vmatpush1.bf16.msra.mxu0 0
      %375 = vmatprep.subr.bf16.mxu0 0
      %376 = vmatpush1.bf16.msra.mxu0 0
      %377 = vmatprep.subr.bf16.mxu0 0
      %378 = vmatpush1.bf16.msra.mxu0 0
      %379 = vmatprep.subr.bf16.mxu0 0
      %380 = vmatpush1.bf16.msra.mxu0 0
      %381 = vmatprep.subr.bf16.mxu0 0
      %382 = vmatpush1.bf16.msra.mxu0 %v369
      %383 = vmatprep.subr.bf16.mxu0 0
      %384 = vmatpush1.bf16.msra.mxu0 %v314
      %385 = vmatprep.subr.bf16.mxu0 0
      %386 = vmatpush1.bf16.msra.mxu0 %v313
      %387 = vmatprep.subr.bf16.mxu0 0
      %388 = vmatpush2.bf16.msra.mxu0 0
      %389 = vmatprep.subr.bf16.mxu0 0
      %390 = vmatpush2.bf16.msra.mxu0 0
      %391 = vmatprep.subr.bf16.mxu0 0
      %392 = vmatpush2.bf16.msra.mxu0 0
      %393 = vmatprep.subr.bf16.mxu0 0
      %394 = vmatpush2.bf16.msra.mxu0 0
      %395 = vmatprep.subr.bf16.mxu0 0
      %396 = vmatpush2.bf16.msra.mxu0 0
      %397 = vmatprep.subr.bf16.mxu0 0
      %398 = vmatpush2.bf16.msra.mxu0 0
      %399 = vmatprep.subr.bf16.mxu0 0
      %400 = vmatpush2.bf16.msra.mxu0 0
      %401 = vmatprep.subr.bf16.mxu0 0
      %402 = vmatpush2.bf16.msra.mxu0 0
      %403 = vmatprep.mubr.bf16.mxu0 0
      %404 = vmatmul.mubr.bf16.gmra.mxu0 %v320
      %v405 = vpop.f32.mrf.mxu0
      %v406 = vadd.f32 0.0, %v405
      %v407 = vpop.f32.mrf.mxu0
      %v408 = vpop.f32.mrf.mxu0
      %v409 = vadd.f32 0.0, %v408
      %v410 = vpop.f32.mrf.mxu0
      %411 = vmatprep.mubr.bf16.mxu0 0
      %412 = vmatmul.mubr.bf16.gmra.mxu0 %v323
      %v413 = vpop.f32.mrf.mxu0
      %v414 = vadd.f32 0.0, %v413
      %v415 = vpop.f32.mrf.mxu0
      %v416 = vpop.f32.mrf.mxu0
      %v417 = vadd.f32 0.0, %v416
      %v418 = vpop.f32.mrf.mxu0
      %419 = vmatprep.mubr.bf16.mxu0 0
      %420 = vmatmul.mubr.bf16.gmra.mxu0 %v326
      %v421 = vpop.f32.mrf.mxu0
      %v422 = vadd.f32 0.0, %v421
      %v423 = vpop.f32.mrf.mxu0
      %v424 = vpop.f32.mrf.mxu0
      %v425 = vadd.f32 0.0, %v424
      %v426 = vpop.f32.mrf.mxu0
      %427 = vmatprep.mubr.bf16.mxu0 0
      %428 = vmatmul.mubr.bf16.gmra.mxu0 %v329
      %v429 = vpop.f32.mrf.mxu0
      %v430 = vadd.f32 0.0, %v429
      %v431 = vpop.f32.mrf.mxu0
      %v432 = vpop.f32.mrf.mxu0
      %v433 = vadd.f32 0.0, %v432
      %v434 = vpop.f32.mrf.mxu0
      %435 = vmatprep.mubr.bf16.mxu0 0
      %436 = vmatmul.mubr.bf16.gmra.mxu0 %v332
      %v437 = vpop.f32.mrf.mxu0
      %v438 = vadd.f32 0.0, %v437
      %v439 = vpop.f32.mrf.mxu0
      %v440 = vpop.f32.mrf.mxu0
      %v441 = vadd.f32 0.0, %v440
      %v442 = vpop.f32.mrf.mxu0
      %443 = vmatprep.mubr.bf16.mxu0 0
      %444 = vmatmul.mubr.bf16.gmra.mxu0 %v335
      %v445 = vpop.f32.mrf.mxu0
      %v446 = vadd.f32 0.0, %v445
      %v447 = vpop.f32.mrf.mxu0
      %v448 = vpop.f32.mrf.mxu0
      %v449 = vadd.f32 0.0, %v448
      %v450 = vpop.f32.mrf.mxu0
      %451 = vmatprep.mubr.bf16.mxu0 0
      %452 = vmatmul.mubr.bf16.gmra.mxu0 %v338
      %v453 = vpop.f32.mrf.mxu0
      %v454 = vadd.f32 0.0, %v453
      %v455 = vpop.f32.mrf.mxu0
      %v456 = vpop.f32.mrf.mxu0
      %v457 = vadd.f32 0.0, %v456
      %v458 = vpop.f32.mrf.mxu0
      %459 = vmatprep.mubr.bf16.mxu0 0
      %460 = vmatmul.mubr.bf16.gmra.mxu0 %v341
      %v461 = vpop.f32.mrf.mxu0
      %v462 = vadd.f32 0.0, %v461
      %v463 = vpop.f32.mrf.mxu0
      %v464 = vpop.f32.mrf.mxu0
      %v465 = vadd.f32 0.0, %v464
      %v466 = vpop.f32.mrf.mxu0
      %467 = vmatprep.mubr.bf16.mxu0 0
      %468 = vmatmul.mubr.bf16.gmra.mxu0 %v344
      %v469 = vpop.f32.mrf.mxu0
      %v470 = vadd.f32 0.0, %v469
      %v471 = vpop.f32.mrf.mxu0
      %v472 = vpop.f32.mrf.mxu0
      %v473 = vadd.f32 0.0, %v472
      %v474 = vpop.f32.mrf.mxu0
      %475 = vmatprep.mubr.bf16.mxu0 0
      %476 = vmatmul.mubr.bf16.gmra.mxu0 %v347
      %v477 = vpop.f32.mrf.mxu0
      %v478 = vadd.f32 0.0, %v477
      %v479 = vpop.f32.mrf.mxu0
      %v480 = vpop.f32.mrf.mxu0
      %v481 = vadd.f32 0.0, %v480
      %v482 = vpop.f32.mrf.mxu0
      %483 = vmatprep.mubr.bf16.mxu0 0
      %484 = vmatmul.mubr.bf16.gmra.mxu0 %v350
      %v485 = vpop.f32.mrf.mxu0
      %v486 = vadd.f32 0.0, %v485
      %v487 = vpop.f32.mrf.mxu0
      %v488 = vpop.f32.mrf.mxu0
      %v489 = vadd.f32 0.0, %v488
      %v490 = vpop.f32.mrf.mxu0
      %491 = vmatprep.mubr.bf16.mxu0 0
      %492 = vmatmul.mubr.bf16.gmra.mxu0 %v353
      %v493 = vpop.f32.mrf.mxu0
      %v494 = vadd.f32 0.0, %v493
      %v495 = vpop.f32.mrf.mxu0
      %v496 = vpop.f32.mrf.mxu0
      %v497 = vadd.f32 0.0, %v496
      %v498 = vpop.f32.mrf.mxu0
      %499 = vmatprep.mubr.bf16.mxu0 0
      %500 = vmatmul.mubr.bf16.gmra.mxu0 %v356
      %v501 = vpop.f32.mrf.mxu0
      %v502 = vadd.f32 0.0, %v501
      %v503 = vpop.f32.mrf.mxu0
      %v504 = vpop.f32.mrf.mxu0
      %v505 = vadd.f32 0.0, %v504
      %v506 = vpop.f32.mrf.mxu0
      %507 = vmatprep.mubr.bf16.mxu0 0
      %508 = vmatmul.mubr.bf16.gmra.mxu0 %v359
      %v509 = vpop.f32.mrf.mxu0
      %v510 = vadd.f32 0.0, %v509
      %v511 = vpop.f32.mrf.mxu0
      %v512 = vpop.f32.mrf.mxu0
      %v513 = vadd.f32 0.0, %v512
      %v514 = vpop.f32.mrf.mxu0
      %515 = vmatprep.mubr.bf16.mxu0 0
      %516 = vmatmul.mubr.bf16.gmra.mxu0 %v362
      %v517 = vpop.f32.mrf.mxu0
      %v518 = vadd.f32 0.0, %v517
      %v519 = vpop.f32.mrf.mxu0
      %v520 = vpop.f32.mrf.mxu0
      %v521 = vadd.f32 0.0, %v520
      %v522 = vpop.f32.mrf.mxu0
      %523 = vmatprep.mubr.bf16.mxu0 0
      %524 = vmatmul.mubr.bf16.gmra.mxu0 %v365
      %v525 = vpop.f32.mrf.mxu0
      %v526 = vadd.f32 0.0, %v525
      %v527 = vpop.f32.mrf.mxu0
      %v528 = vpop.f32.mrf.mxu0
      %v529 = vadd.f32 0.0, %v528
      %v530 = vpop.f32.mrf.mxu0
      %531 = vdwg.mxu0
      %532 = vst [vmem:[%s179] sm:$0xff] %v406
      %533 = vst [vmem:[%s179 + $0x8] sm:$0xff] %v409
      %534 = vst [vmem:[%s179 + $0x10] sm:$0xff] %v414
      %535 = vst [vmem:[%s179 + $0x18] sm:$0xff] %v417
      %536 = vst [vmem:[%s179 + $0x20] sm:$0xff] %v422
      %537 = vst [vmem:[%s179 + $0x28] sm:$0xff] %v425
      %538 = vst [vmem:[%s179 + $0x30] sm:$0xff] %v430
      %539 = vst [vmem:[%s179 + $0x38] sm:$0xff] %v433
      %540 = vst [vmem:[%s179 + $0x40] sm:$0xff] %v438
      %541 = vst [vmem:[%s179 + $0x48] sm:$0xff] %v441
      %542 = vst [vmem:[%s179 + $0x50] sm:$0xff] %v446
      %543 = vst [vmem:[%s179 + $0x58] sm:$0xff] %v449
      %544 = vst [vmem:[%s179 + $0x60] sm:$0xff] %v454
      %545 = vst [vmem:[%s179 + $0x68] sm:$0xff] %v457
      %546 = vst [vmem:[%s179 + $0x70] sm:$0xff] %v462
      %547 = vst [vmem:[%s179 + $0x78] sm:$0xff] %v465
      %548 = vst [vmem:[%s179 + $0x80] sm:$0xff] %v470
      %549 = vst [vmem:[%s179 + $0x88] sm:$0xff] %v473
      %550 = vst [vmem:[%s179 + $0x90] sm:$0xff] %v478
      %551 = vst [vmem:[%s179 + $0x98] sm:$0xff] %v481
      %552 = vst [vmem:[%s179 + $0xa0] sm:$0xff] %v486
      %553 = vst [vmem:[%s179 + $0xa8] sm:$0xff] %v489
      %554 = vst [vmem:[%s179 + $0xb0] sm:$0xff] %v494
      %555 = vst [vmem:[%s179 + $0xb8] sm:$0xff] %v497
      %556 = vst [vmem:[%s179 + $0xc0] sm:$0xff] %v502
      %557 = vst [vmem:[%s179 + $0xc8] sm:$0xff] %v505
      %558 = vst [vmem:[%s179 + $0xd0] sm:$0xff] %v510
      %559 = vst [vmem:[%s179 + $0xd8] sm:$0xff] %v513
      %560 = vst [vmem:[%s179 + $0xe0] sm:$0xff] %v518
      %561 = vst [vmem:[%s179 + $0xe8] sm:$0xff] %v521
      %562 = vst [vmem:[%s179 + $0xf0] sm:$0xff] %v526
      %563 = vst [vmem:[%s179 + $0xf8] sm:$0xff] %v529
      %v564 = vadd.f32 %v406, %v409
      %v565 = vadd.f32 %v564, %v414
      %v566 = vadd.f32 %v565, %v417
      %v567 = vadd.f32 %v566, %v422
      %v568 = vadd.f32 %v567, %v425
      %v569 = vadd.f32 %v568, %v430
      %v570 = vadd.f32 %v569, %v433
      %v571 = vadd.f32 %v570, %v438
      %v572 = vadd.f32 %v571, %v441
      %v573 = vadd.f32 %v572, %v446
      %v574 = vadd.f32 %v573, %v449
      %v575 = vadd.f32 %v574, %v454
      %v576 = vadd.f32 %v575, %v457
      %v577 = vadd.f32 %v576, %v462
      %v578 = vadd.f32 %v577, %v465
      %v579 = vadd.f32 %v578, %v470
      %v580 = vadd.f32 %v579, %v473
      %v581 = vadd.f32 %v580, %v478
      %v582 = vadd.f32 %v581, %v481
      %v583 = vadd.f32 %v582, %v486
      %v584 = vadd.f32 %v583, %v489
      %v585 = vadd.f32 %v584, %v494
      %v586 = vadd.f32 %v585, %v497
      %v587 = vadd.f32 %v586, %v502
      %v588 = vadd.f32 %v587, %v505
      %v589 = vadd.f32 %v588, %v510
      %v590 = vadd.f32 %v589, %v513
      %v591 = vadd.f32 %v590, %v518
      %v592 = vadd.f32 %v591, %v521
      %v593 = vadd.f32 %v592, %v526
      %v594 = vadd.f32 %v593, %v529
      %v595 = vrot.slane %v594, 4
      %v596 = vadd.f32 %v594, %v595
      %v597 = vrot.slane %v596, 2
      %v598 = vadd.f32 %v596, %v597
      %v599 = vrot.slane %v598, 1
      %v600 = vadd.f32 %v598, %v599
      %v601 = vmul.f32 %v406, %v406
      %v602 = vmul.f32 %v409, %v409
      %v603 = vmul.f32 %v414, %v414
      %v604 = vmul.f32 %v417, %v417
      %v605 = vmul.f32 %v422, %v422
      %v606 = vmul.f32 %v425, %v425
      %v607 = vmul.f32 %v430, %v430
      %v608 = vmul.f32 %v433, %v433
      %v609 = vmul.f32 %v438, %v438
      %v610 = vmul.f32 %v441, %v441
      %v611 = vmul.f32 %v446, %v446
      %v612 = vmul.f32 %v449, %v449
      %v613 = vmul.f32 %v454, %v454
      %v614 = vmul.f32 %v457, %v457
      %v615 = vmul.f32 %v462, %v462
      %v616 = vmul.f32 %v465, %v465
      %v617 = vmul.f32 %v470, %v470
      %v618 = vmul.f32 %v473, %v473
      %v619 = vmul.f32 %v478, %v478
      %v620 = vmul.f32 %v481, %v481
      %v621 = vmul.f32 %v486, %v486
      %v622 = vmul.f32 %v489, %v489
      %v623 = vmul.f32 %v494, %v494
      %v624 = vmul.f32 %v497, %v497
      %v625 = vmul.f32 %v502, %v502
      %v626 = vmul.f32 %v505, %v505
      %v627 = vmul.f32 %v510, %v510
      %v628 = vmul.f32 %v513, %v513
      %v629 = vmul.f32 %v518, %v518
      %v630 = vmul.f32 %v521, %v521
      %v631 = vmul.f32 %v526, %v526
      %v632 = vmul.f32 %v529, %v529
      %v633 = vadd.f32 %v601, %v602
      %v634 = vadd.f32 %v633, %v603
      %v635 = vadd.f32 %v634, %v604
      %v636 = vadd.f32 %v635, %v605
      %v637 = vadd.f32 %v636, %v606
      %v638 = vadd.f32 %v637, %v607
      %v639 = vadd.f32 %v638, %v608
      %v640 = vadd.f32 %v639, %v609
      %v641 = vadd.f32 %v640, %v610
      %v642 = vadd.f32 %v641, %v611
      %v643 = vadd.f32 %v642, %v612
      %v644 = vadd.f32 %v643, %v613
      %v645 = vadd.f32 %v644, %v614
      %v646 = vadd.f32 %v645, %v615
      %v647 = vadd.f32 %v646, %v616
      %v648 = vadd.f32 %v647, %v617
      %v649 = vadd.f32 %v648, %v618
      %v650 = vadd.f32 %v649, %v619
      %v651 = vadd.f32 %v650, %v620
      %v652 = vadd.f32 %v651, %v621
      %v653 = vadd.f32 %v652, %v622
      %v654 = vadd.f32 %v653, %v623
      %v655 = vadd.f32 %v654, %v624
      %v656 = vadd.f32 %v655, %v625
      %v657 = vadd.f32 %v656, %v626
      %v658 = vadd.f32 %v657, %v627
      %v659 = vadd.f32 %v658, %v628
      %v660 = vadd.f32 %v659, %v629
      %v661 = vadd.f32 %v660, %v630
      %v662 = vadd.f32 %v661, %v631
      %v663 = vadd.f32 %v662, %v632
      %v664 = vrot.slane %v663, 4
      %v665 = vadd.f32 %v663, %v664
      %v666 = vrot.slane %v665, 2
      %v667 = vadd.f32 %v665, %v666
      %v668 = vrot.slane %v667, 1
      %v669 = vadd.f32 %v667, %v668
      %vm670 = vcmask 1040384
      %v671 = vsel %vm670, %v600, %v669
      %672 = vst [vmem:[%s184] sm:$0x3] %v671
      %s673 = smul.u32 32, %s15
      %p674 = scmp.lt.s32.totalorder %s673, 63
      %s675 = scalar_select %p674, %s673, 63
      %s676 = smul.addr %s675, 8
      %s677 = scalar_lea.vmem %s2, %s676
      %p678 = scmp.lt.s32.totalorder %s15, 1
      %s679 = scalar_select %p678, %s15, 1
      %s680 = smul.addr %s679, 2
      %s681 = scalar_lea.vmem %s3, %s680
      // Predicated region
      $region29: #{conv_bn_lrelu.2} parent=27 // pred_check
        %p682 = pneg %p80
      $region30: #{conv_bn_lrelu.2} parent=27 // pred_check_branch
        %684 = sbr.rel (%p682) target = $region32
      $region31: #{conv_bn_lrelu.2} parent=27 // pred_region
        %s685 = smul.u32 32, %s15
      $region32: #{conv_bn_lrelu.2} parent=27 // pred_fallthru
        _
      // Predicated region
      $region33: #{conv_bn_lrelu.2} parent=27 // pred_check
        %p686 = pneg %p106
      $region34: #{conv_bn_lrelu.2} parent=27 // pred_check_branch
        %688 = sbr.rel (%p686) target = $region36
      $region35: #{conv_bn_lrelu.2} parent=27 // pred_region
        _
      $region36: #{conv_bn_lrelu.2} parent=27 // pred_fallthru
        _
    $region28: #{conv_bn_lrelu.2} parent=5 // pred_fallthru
      _
    %p689 = scmp.le.s32.totalorder 2, %s10
    // Predicated region
    $region37: #{conv_bn_lrelu.2} parent=5 // pred_check
      %p690 = pneg %p689
    $region38: #{conv_bn_lrelu.2} parent=5 // pred_check_branch
      %692 = sbr.rel (%p690) target = $region40
    $region39: #{conv_bn_lrelu.2} parent=5 // pred_region
      %s693 = ssub.s32 %s10, 2
      // Predicated region
      $region41: #{conv_bn_lrelu.2} parent=39 // pred_check
        %p694 = pneg %p86
      $region42: #{conv_bn_lrelu.2} parent=39 // pred_check_branch
        %696 = sbr.rel (%p694) target = $region44
      $region43: #{conv_bn_lrelu.2} parent=39 // pred_region
        %s697 = smul.u32 32, %s16
        %p698 = scmp.lt.s32.totalorder %s697, 63
        %s699 = scalar_select %p698, %s697, 63
        %s700 = smul.addr %s699, 8
        %s701 = scalar_lea.vmem %s2, %s700
      $region44: #{conv_bn_lrelu.2} parent=39 // pred_fallthru
        _
      // Predicated region
      $region45: #{conv_bn_lrelu.2} parent=39 // pred_check
        %p702 = pneg %p112
      $region46: #{conv_bn_lrelu.2} parent=39 // pred_check_branch
        %704 = sbr.rel (%p702) target = $region48
      $region47: #{conv_bn_lrelu.2} parent=39 // pred_region
        %p705 = scmp.lt.s32.totalorder %s16, 1
        %s706 = scalar_select %p705, %s16, 1
        %s707 = smul.addr %s706, 2
        %s708 = scalar_lea.vmem %s3, %s707
      $region48: #{conv_bn_lrelu.2} parent=39 // pred_fallthru
        _
    $region40: #{conv_bn_lrelu.2} parent=5 // pred_fallthru
      _
  $region6: #{conv_bn_lrelu.2} parent=0 // loop_footer
    %s14 = sadd.s32 1, %s10
  $region7: #{conv_bn_lrelu.2} parent=0 // loop_footer_branch
    %9 = sbr.rel target = $region3
  $region8: #{conv_bn_lrelu.2} parent=0 // loop_exit
    _

</llo_original>
